<compile_context>
chip_gen: v7x
topology: tpu7x:2x2x1
jax: 0.10.0
libtpu: 0.0.40
codegen_flags: <defaults>
</compile_context>

<pallas_src>
import functools

import jax
import jax.numpy as jnp
from jax.experimental import pallas as pl
from jax.experimental.pallas import tpu as pltpu


def _round_up(x, m):
    return ((x + m - 1) // m) * m


def _value_kernel(x_ref, w1_ref, b1_ref, w2_ref, b2_ref, w3_ref, b3_ref, o_ref):
    # x_ref:  (bb, D)   bf16
    # w1_ref: (D, H1)   bf16     b1_ref: (1, H1) f32
    # w2_ref: (H1, H2)  bf16     b2_ref: (1, H2) f32
    # w3_ref: (1, H2)   f32      b3_ref: (1, 1)  f32
    # o_ref:  (1, bb)   f32   (lane-dense output row for this batch tile)
    x = x_ref[...]

    # Layer 1: MXU matmul (bf16 in, f32 accumulate) + f32 bias + ReLU (VPU).
    h1 = jnp.dot(x, w1_ref[...], preferred_element_type=jnp.float32)
    h1 = jnp.maximum(h1 + b1_ref[...], 0.0)

    # Layer 2: same pattern; recast activations to bf16 for the MXU.
    h2 = jnp.dot(h1.astype(jnp.bfloat16), w2_ref[...],
                 preferred_element_type=jnp.float32)
    h2 = jnp.maximum(h2 + b2_ref[...], 0.0)

    # Layer 3 (out_features == 1): VPU multiply + lane reduction instead of an
    # N=1 MXU pass. Result is a (bb,) vector stored lane-dense as (1, bb).
    v = jnp.sum(h2 * w3_ref[...], axis=-1) + b3_ref[0, 0]
    o_ref[...] = v.reshape(1, -1).astype(o_ref.dtype)


@functools.partial(jax.jit, static_argnames=("block_b",))
def value_network_forward(state, params, *, block_b=256):
    """Runs the ValueNetwork forward pass with a Pallas TPU kernel.

    state:  (B, input_dims) float32
    params: dict with w1 (D,H1), b1 (1,H1), w2 (H1,H2), b2 (1,H2),
            w3 (H2,1), b3 (1,1)   (all float32)
    returns (B, 1) float32
    """
    w1, b1 = params["w1"], params["b1"]
    w2, b2 = params["w2"], params["b2"]
    w3, b3 = params["w3"], params["b3"]

    B, D = state.shape
    H1 = w1.shape[1]
    H2 = w2.shape[1]

    # MXU-friendly batch tile: multiple of 128, capped by (padded) batch size.
    bb = _round_up(min(block_b, _round_up(B, 128)), 128)
    B_pad = _round_up(B, bb)
    num_blocks = B_pad // bb

    x = state
    if B_pad != B:
        x = jnp.pad(x, ((0, B_pad - B), (0, 0)))

    # bf16 inputs for the MXU; biases and the tiny final weight row stay f32
    # (elementwise epilogue runs in f32 — v5e VPU has no bf16).
    x_bf = x.astype(jnp.bfloat16)
    w1_bf = w1.astype(jnp.bfloat16)
    w2_bf = w2.astype(jnp.bfloat16)
    w3_row = w3.reshape(1, H2).astype(jnp.float32)
    b3_2d = b3.reshape(1, 1).astype(jnp.float32)

    flops = 2 * B_pad * (D * H1 + H1 * H2 + H2)
    bytes_accessed = (
        x_bf.size * 2 + w1_bf.size * 2 + w2_bf.size * 2
        + (b1.size + b2.size + w3_row.size + b3_2d.size) * 4
        + B_pad * 4
    )
    cost = pl.CostEstimate(flops=flops, transcendentals=0,
                           bytes_accessed=bytes_accessed)

    out2d = pl.pallas_call(
        _value_kernel,
        out_shape=jax.ShapeDtypeStruct((num_blocks, bb), jnp.float32),
        grid_spec=pl.GridSpec(
            grid=(num_blocks,),
            in_specs=[
                # batch-tiled activations
                pl.BlockSpec((bb, D), lambda i: (i, 0)),
                # weights/biases are resident (same block for every grid step)
                pl.BlockSpec((D, H1), lambda i: (0, 0)),
                pl.BlockSpec((1, H1), lambda i: (0, 0)),
                pl.BlockSpec((H1, H2), lambda i: (0, 0)),
                pl.BlockSpec((1, H2), lambda i: (0, 0)),
                pl.BlockSpec((1, H2), lambda i: (0, 0)),
                pl.BlockSpec((1, 1), lambda i: (0, 0)),
            ],
            # lane-dense output slab: one (1, bb) row per batch tile
            out_specs=pl.BlockSpec((1, bb), lambda i: (i, 0)),
        ),
        compiler_params=pltpu.CompilerParams(
            dimension_semantics=("parallel",),
        ),
        cost_estimate=cost,
    )(x_bf, w1_bf, b1, w2_bf, b2, w3_row, b3_2d)

    # (num_blocks, bb) row-major == padded batch order; strip padding.
    return out2d.reshape(B_pad)[:B].reshape(B, 1)


def init_value_network_params(key, input_dims, fc_dims=(256, 256)):
    """Deterministic init mimicking PyTorch nn.Linear default (U[-1/sqrt(fan_in), +])."""
    params = {}
    dims = [input_dims, *fc_dims, 1]
    for li in range(len(dims) - 1):
        fan_in, fan_out = dims[li], dims[li + 1]
        key, kw, kb = jax.random.split(key, 3)
        bound = 1.0 / jnp.sqrt(jnp.float32(fan_in))
        # stored transposed: (in_features, out_features)
        w = jax.random.uniform(kw, (fan_in, fan_out), jnp.float32, -bound, bound)
        b = jax.random.uniform(kb, (1, fan_out), jnp.float32, -bound, bound)
        params[f"w{li + 1}"] = w
        params[f"b{li + 1}"] = b
    return params


def value_network_reference(state, params):
    """Pure-JAX f32 reference for correctness check."""
    h = jnp.maximum(state @ params["w1"] + params["b1"], 0.0)
    h = jnp.maximum(h @ params["w2"] + params["b2"], 0.0)
    return h @ params["w3"] + params["b3"]


if __name__ == "__main__":
    key = jax.random.PRNGKey(0)
    input_dims = 16
    batch = 8

    kp, kx = jax.random.split(key)
    params = init_value_network_params(kp, input_dims, fc_dims=(256, 256))
    state = jax.random.normal(kx, (batch, input_dims), jnp.float32)

    out = value_network_forward(state, params)
    out = jax.block_until_ready(out)

    ref = value_network_reference(state, params)
    assert out.shape == (batch, 1), out.shape
    # bf16 matmul inputs -> loosened tolerance vs. the f32 reference.
    assert jnp.allclose(out, ref, atol=3e-2, rtol=3e-2), (
        f"max abs err {jnp.max(jnp.abs(out - ref))}"
    )

    print("KERNEL_OK")
</pallas_src>

<mosaic_0001>
module attributes {stable_mosaic.version = 11 : i64} {
  func.func @_value_kernel(%arg0: i32, %arg1: memref<128x16xbf16, #tpu.memory_space<vmem>>, %arg2: memref<16x256xbf16, #tpu.memory_space<vmem>>, %arg3: memref<1x256xf32, #tpu.memory_space<vmem>>, %arg4: memref<256x256xbf16, #tpu.memory_space<vmem>>, %arg5: memref<1x256xf32, #tpu.memory_space<vmem>>, %arg6: memref<1x256xf32, #tpu.memory_space<vmem>>, %arg7: memref<1x1xf32, #tpu.memory_space<vmem>>, %arg8: memref<1x128xf32, #tpu.memory_space<vmem>>) attributes {dimension_semantics = [#tpu.dimension_semantics<parallel>], iteration_bounds = array<i64: 1>, scalar_prefetch = 0 : i64, scratch_operands = 0 : i64, tpu.core_type = #tpu.core_type<tc>, window_params = [{transform_indices = @transform_0, window_bounds = array<i64: 128, 16>}, {pipeline_mode = #tpu.pipeline_mode<synchronous>, transform_indices = @transform_1, window_bounds = array<i64: 16, 256>}, {pipeline_mode = #tpu.pipeline_mode<synchronous>, transform_indices = @transform_2, window_bounds = array<i64: 1, 256>}, {pipeline_mode = #tpu.pipeline_mode<synchronous>, transform_indices = @transform_3, window_bounds = array<i64: 256, 256>}, {pipeline_mode = #tpu.pipeline_mode<synchronous>, transform_indices = @transform_4, window_bounds = array<i64: 1, 256>}, {pipeline_mode = #tpu.pipeline_mode<synchronous>, transform_indices = @transform_5, window_bounds = array<i64: 1, 256>}, {pipeline_mode = #tpu.pipeline_mode<synchronous>, transform_indices = @transform_6, window_bounds = array<i64: 1, 1>}, {transform_indices = @transform_7, window_bounds = array<i64: 1, 128>}]} {
    %c0 = arith.constant 0 : index
    %c0_0 = arith.constant 0 : index
    %0 = vector.load %arg1[%c0, %c0_0] : memref<128x16xbf16, #tpu.memory_space<vmem>>, vector<128x16xbf16>
    %c0_1 = arith.constant 0 : index
    %c0_2 = arith.constant 0 : index
    %1 = vector.load %arg2[%c0_1, %c0_2] : memref<16x256xbf16, #tpu.memory_space<vmem>>, vector<16x256xbf16>
    %cst = arith.constant dense<0.000000e+00> : vector<128x256xf32>
    %2 = tpu.matmul %0, %1, %cst {dimension_numbers = #tpu.dot_dimension_numbers<[1], [0], [0], [1], [0, 0, 1, 1], [], []>} : vector<128x16xbf16>, vector<16x256xbf16>, vector<128x256xf32> -> vector<128x256xf32>
    %c0_3 = arith.constant 0 : index
    %c0_4 = arith.constant 0 : index
    %3 = vector.load %arg3[%c0_3, %c0_4] : memref<1x256xf32, #tpu.memory_space<vmem>>, vector<1x256xf32>
    %4 = vector.broadcast %3 : vector<1x256xf32> to vector<128x256xf32>
    %5 = arith.addf %2, %4 : vector<128x256xf32>
    %cst_5 = arith.constant 0.000000e+00 : f32
    %6 = vector.broadcast %cst_5 : f32 to vector<128x256xf32>
    %7 = arith.maximumf %5, %6 : vector<128x256xf32>
    %8 = arith.truncf %7 : vector<128x256xf32> to vector<128x256xbf16>
    %c0_6 = arith.constant 0 : index
    %c0_7 = arith.constant 0 : index
    %9 = vector.load %arg4[%c0_6, %c0_7] : memref<256x256xbf16, #tpu.memory_space<vmem>>, vector<256x256xbf16>
    %cst_8 = arith.constant dense<0.000000e+00> : vector<128x256xf32>
    %10 = tpu.matmul %8, %9, %cst_8 {dimension_numbers = #tpu.dot_dimension_numbers<[1], [0], [0], [1], [0, 0, 1, 1], [], []>} : vector<128x256xbf16>, vector<256x256xbf16>, vector<128x256xf32> -> vector<128x256xf32>
    %c0_9 = arith.constant 0 : index
    %c0_10 = arith.constant 0 : index
    %11 = vector.load %arg5[%c0_9, %c0_10] : memref<1x256xf32, #tpu.memory_space<vmem>>, vector<1x256xf32>
    %12 = vector.broadcast %11 : vector<1x256xf32> to vector<128x256xf32>
    %13 = arith.addf %10, %12 : vector<128x256xf32>
    %cst_11 = arith.constant 0.000000e+00 : f32
    %14 = vector.broadcast %cst_11 : f32 to vector<128x256xf32>
    %15 = arith.maximumf %13, %14 : vector<128x256xf32>
    %c0_12 = arith.constant 0 : index
    %c0_13 = arith.constant 0 : index
    %16 = vector.load %arg6[%c0_12, %c0_13] : memref<1x256xf32, #tpu.memory_space<vmem>>, vector<1x256xf32>
    %17 = vector.broadcast %16 : vector<1x256xf32> to vector<128x256xf32>
    %18 = arith.mulf %15, %17 : vector<128x256xf32>
    %cst_14 = arith.constant dense<0.000000e+00> : vector<128xf32>
    %19 = vector.multi_reduction <add>, %18, %cst_14 [1] : vector<128x256xf32> to vector<128xf32>
    %c0_15 = arith.constant 0 : index
    %c0_16 = arith.constant 0 : index
    %20 = vector.load %arg7[%c0_15, %c0_16] : memref<1x1xf32, #tpu.memory_space<vmem>>, vector<1x1xf32>
    %21 = vector.extract %20[0, 0] : f32 from vector<1x1xf32>
    %22 = vector.broadcast %21 : f32 to vector<128xf32>
    %23 = arith.addf %19, %22 : vector<128xf32>
    %24 = vector.shape_cast %23 : vector<128xf32> to vector<1x128xf32>
    %c0_17 = arith.constant 0 : index
    %c0_18 = arith.constant 0 : index
    %25 = vector.load %arg8[%c0_17, %c0_18] : memref<1x128xf32, #tpu.memory_space<vmem>>, vector<1x128xf32>
    tpu.vector_store %arg8[%c0_17, %c0_18], %24 {strides = array<i32>} : memref<1x128xf32, #tpu.memory_space<vmem>>, vector<1x128xf32>,
    return
  }
  func.func @transform_0(%arg0: i32) -> (i32, i32) {
    %c0_i32 = arith.constant 0 : i32
    %c0_i32_0 = arith.constant 0 : i32
    return %arg0, %c0_i32 : i32, i32
  }
  func.func @transform_1(%arg0: i32) -> (i32, i32) {
    %c0_i32 = arith.constant 0 : i32
    %c0_i32_0 = arith.constant 0 : i32
    %c0_i32_1 = arith.constant 0 : i32
    return %c0_i32, %c0_i32_0 : i32, i32
  }
  func.func @transform_2(%arg0: i32) -> (i32, i32) {
    %c0_i32 = arith.constant 0 : i32
    %c0_i32_0 = arith.constant 0 : i32
    %c0_i32_1 = arith.constant 0 : i32
    return %c0_i32, %c0_i32_0 : i32, i32
  }
  func.func @transform_3(%arg0: i32) -> (i32, i32) {
    %c0_i32 = arith.constant 0 : i32
    %c0_i32_0 = arith.constant 0 : i32
    %c0_i32_1 = arith.constant 0 : i32
    return %c0_i32, %c0_i32_0 : i32, i32
  }
  func.func @transform_4(%arg0: i32) -> (i32, i32) {
    %c0_i32 = arith.constant 0 : i32
    %c0_i32_0 = arith.constant 0 : i32
    %c0_i32_1 = arith.constant 0 : i32
    return %c0_i32, %c0_i32_0 : i32, i32
  }
  func.func @transform_5(%arg0: i32) -> (i32, i32) {
    %c0_i32 = arith.constant 0 : i32
    %c0_i32_0 = arith.constant 0 : i32
    %c0_i32_1 = arith.constant 0 : i32
    return %c0_i32, %c0_i32_0 : i32, i32
  }
  func.func @transform_6(%arg0: i32) -> (i32, i32) {
    %c0_i32 = arith.constant 0 : i32
    %c0_i32_0 = arith.constant 0 : i32
    %c0_i32_1 = arith.constant 0 : i32
    return %c0_i32, %c0_i32_0 : i32, i32
  }
  func.func @transform_7(%arg0: i32) -> (i32, i32) {
    %c0_i32 = arith.constant 0 : i32
    %c0_i32_0 = arith.constant 0 : i32
    return %arg0, %c0_i32 : i32, i32
  }
}

</mosaic_0001>

<llo_original>
// kernel: value_network_forward.1
$region0: #{value_network_forward.1}
  #allocation0 [shape = 'u32[]', space=smem, size = 0x4, offset = 0x4, fixed_abs, tag = 'smem constant byte address 0x4 - core index']
  #allocation1 [shape = 'u32[144,128]{1,0:T(1,128)}', space=vmem, size = 0x12000, scoped, tag = 'internal scratch']
  #allocation2 [shape = 'f32[1,1]{1,0:T(1,128)S(1)}', space=vmem, size = 0x200, scoped, tag = 'scoped memory for value_network_forward.1']
  %s0 = inlined_call_operand.vmem [shape: bf16[128,16], index: 0, kind: input, shape index: {}]
  %s1 = inlined_call_operand.vmem [shape: bf16[16,256], index: 1, kind: input, shape index: {}]
  %s2 = inlined_call_operand.vmem [shape: f32[1,256], index: 2, kind: input, shape index: {}]
  %s3 = inlined_call_operand.vmem [shape: bf16[256,256], index: 3, kind: input, shape index: {}]
  %s4 = inlined_call_operand.vmem [shape: f32[1,256], index: 4, kind: input, shape index: {}]
  %s5 = inlined_call_operand.vmem [shape: f32[1,256], index: 5, kind: input, shape index: {}]
  %s6 = inlined_call_operand.<no memory space> [shape: f32[1,1], index: 6, kind: input, shape index: {}]
  %s7 = inlined_call_operand.vmem [shape: f32[1,128], index: 7, kind: output, shape index: {}]
  %s8 = sld [smem:[#allocation0]]
  $region38: #{value_network_forward.1} parent=0
    _
  %s10 = ssub.s32 1, %s8
  %s11 = scalar_select 0, %s10, %s8
  %v12 = vstv %s6
  %13 = vst [vmem:[#allocation2] sm:$0x1] %v12
  // Predicated region
  $region2: #{value_network_forward.1} parent=0 // pred_check
    _
  $region3: #{value_network_forward.1} parent=0 // pred_check_branch
    %15 = sbr.rel (0) target = $region5
  $region4: #{value_network_forward.1} parent=0 // pred_region
    _
  $region5: #{value_network_forward.1} parent=0 // pred_fallthru
    _
  // Predicated region
  $region6: #{value_network_forward.1} parent=0 // pred_check
    _
  $region7: #{value_network_forward.1} parent=0 // pred_check_branch
    %17 = sbr.rel (0) target = $region9
  $region8: #{value_network_forward.1} parent=0 // pred_region
    _
  $region9: #{value_network_forward.1} parent=0 // pred_fallthru
    _
  // Predicated region
  $region10: #{value_network_forward.1} parent=0 // pred_check
    _
  $region11: #{value_network_forward.1} parent=0 // pred_check_branch
    %19 = sbr.rel (0) target = $region13
  $region12: #{value_network_forward.1} parent=0 // pred_region
    _
  $region13: #{value_network_forward.1} parent=0 // pred_fallthru
    _
  // Predicated region
  $region14: #{value_network_forward.1} parent=0 // pred_check
    _
  $region15: #{value_network_forward.1} parent=0 // pred_check_branch
    %21 = sbr.rel (0) target = $region17
  $region16: #{value_network_forward.1} parent=0 // pred_region
    _
  $region17: #{value_network_forward.1} parent=0 // pred_fallthru
    _
  // Predicated region
  $region18: #{value_network_forward.1} parent=0 // pred_check
    _
  $region19: #{value_network_forward.1} parent=0 // pred_check_branch
    %23 = sbr.rel (0) target = $region21
  $region20: #{value_network_forward.1} parent=0 // pred_region
    _
  $region21: #{value_network_forward.1} parent=0 // pred_fallthru
    _
  // Predicated region
  $region22: #{value_network_forward.1} parent=0 // pred_check
    _
  $region23: #{value_network_forward.1} parent=0 // pred_check_branch
    %25 = sbr.rel (0) target = $region25
  $region24: #{value_network_forward.1} parent=0 // pred_region
    _
  $region25: #{value_network_forward.1} parent=0 // pred_fallthru
    _
  // Predicated region
  $region26: #{value_network_forward.1} parent=0 // pred_check
    _
  $region27: #{value_network_forward.1} parent=0 // pred_check_branch
    %27 = sbr.rel (0) target = $region29
  $region28: #{value_network_forward.1} parent=0 // pred_region
    _
  $region29: #{value_network_forward.1} parent=0 // pred_fallthru
    _
  %v29 = vld [vmem:[%s0] sm:$0xf]
  %v30 = vld [vmem:[%s0 + $0x4] sm:$0xf]
  %v31 = vld [vmem:[%s0 + $0x8] sm:$0xf]
  %v32 = vld [vmem:[%s0 + $0xc] sm:$0xf]
  %v33 = vld [vmem:[%s0 + $0x10] sm:$0xf]
  %v34 = vld [vmem:[%s0 + $0x14] sm:$0xf]
  %v35 = vld [vmem:[%s0 + $0x18] sm:$0xf]
  %v36 = vld [vmem:[%s0 + $0x1c] sm:$0xf]
  %v37 = vld [vmem:[%s0 + $0x20] sm:$0xf]
  %v38 = vld [vmem:[%s0 + $0x24] sm:$0xf]
  %v39 = vld [vmem:[%s0 + $0x28] sm:$0xf]
  %v40 = vld [vmem:[%s0 + $0x2c] sm:$0xf]
  %v41 = vld [vmem:[%s0 + $0x30] sm:$0xf]
  %v42 = vld [vmem:[%s0 + $0x34] sm:$0xf]
  %v43 = vld [vmem:[%s0 + $0x38] sm:$0xf]
  %v44 = vld [vmem:[%s0 + $0x3c] sm:$0xf]
  %v45 = vld [vmem:[%s1] sm:$0xff]
  %v46 = vld [vmem:[%s1 + $0x8] sm:$0xff]
  %v47 = vld [vmem:[%s2] sm:$0x3]
  %v49 = vlaneseq
  %v50 = vshrl.u32 %v49, 7
  %v51 = vsub.s32 0, %v50
  %v52 = vrot.slane %v47, %v51
  %v53 = vlaneseq
  %v54 = vshrl.u32 %v53, 7
  %v55 = vsub.s32 1, %v54
  %v56 = vrot.slane %v47, %v55
  %v75 = vunpack.c.l.b16 %v29
  %v76 = vunpack.c.l.b16 %v30
  %v77 = vunpack.c.l.b16 %v31
  %v78 = vunpack.c.l.b16 %v32
  %v79 = vunpack.c.l.b16 %v33
  %v80 = vunpack.c.l.b16 %v34
  %v81 = vunpack.c.l.b16 %v35
  %v82 = vunpack.c.l.b16 %v36
  %v83 = vunpack.c.l.b16 %v37
  %v84 = vunpack.c.l.b16 %v38
  %v85 = vunpack.c.l.b16 %v39
  %v86 = vunpack.c.l.b16 %v40
  %v87 = vunpack.c.l.b16 %v41
  %v88 = vunpack.c.l.b16 %v42
  %v89 = vunpack.c.l.b16 %v43
  %v90 = vunpack.c.l.b16 %v44
  %v91 = vpack.c.b16 %v76, %v75
  %v92 = vpack.c.b16 %v78, %v77
  %v93 = vpack.c.b16 %v80, %v79
  %v94 = vpack.c.b16 %v82, %v81
  %v95 = vpack.c.b16 %v84, %v83
  %v96 = vpack.c.b16 %v86, %v85
  %v97 = vpack.c.b16 %v88, %v87
  %v98 = vpack.c.b16 %v90, %v89
  %v101 = vunpack.c.l.b16 %v45
  %v102 = vunpack.c.h.b16 %v45
  %v103 = vunpack.c.l.b16 %v46
  %v104 = vunpack.c.h.b16 %v46
  %v105 = vpack.c.b16 %v103, %v101
  %v106 = vpack.c.b16 %v104, %v102
  %vm109 = vcmask 130048
  %v111 = vsel %vm109, %v91, 0
  %v114 = vsel %vm109, %v92, 0
  %v117 = vsel %vm109, %v93, 0
  %v120 = vsel %vm109, %v94, 0
  %v123 = vsel %vm109, %v95, 0
  %v126 = vsel %vm109, %v96, 0
  %v129 = vsel %vm109, %v97, 0
  %v132 = vsel %vm109, %v98, 0
  %134 = vmatprep.subr.bf16.mxu0 %v106
  %135 = vmatpush1.bf16.msra.mxu0 %v105
  %136 = vmatprep.subr.bf16.mxu0 0
  %137 = vmatpush1.bf16.msra.mxu0 0
  %138 = vmatprep.subr.bf16.mxu0 0
  %139 = vmatpush1.bf16.msra.mxu0 0
  %140 = vmatprep.subr.bf16.mxu0 0
  %141 = vmatpush1.bf16.msra.mxu0 0
  %142 = vmatprep.subr.bf16.mxu0 0
  %143 = vmatpush1.bf16.msra.mxu0 0
  %144 = vmatprep.subr.bf16.mxu0 0
  %145 = vmatpush1.bf16.msra.mxu0 0
  %146 = vmatprep.subr.bf16.mxu0 0
  %147 = vmatpush1.bf16.msra.mxu0 0
  %148 = vmatprep.subr.bf16.mxu0 0
  %149 = vmatpush1.bf16.msra.mxu0 0
  %150 = vmatprep.subr.bf16.mxu0 0
  %151 = vmatpush1.bf16.msra.mxu0 0
  %152 = vmatprep.subr.bf16.mxu0 0
  %153 = vmatpush1.bf16.msra.mxu0 0
  %154 = vmatprep.subr.bf16.mxu0 0
  %155 = vmatpush1.bf16.msra.mxu0 0
  %156 = vmatprep.subr.bf16.mxu0 0
  %157 = vmatpush1.bf16.msra.mxu0 0
  %158 = vmatprep.subr.bf16.mxu0 0
  %159 = vmatpush1.bf16.msra.mxu0 0
  %160 = vmatprep.subr.bf16.mxu0 0
  %161 = vmatpush1.bf16.msra.mxu0 0
  %162 = vmatprep.subr.bf16.mxu0 0
  %163 = vmatpush1.bf16.msra.mxu0 0
  %164 = vmatprep.subr.bf16.mxu0 0
  %165 = vmatpush1.bf16.msra.mxu0 0
  %166 = vmatprep.mubr.bf16.mxu0 0
  %167 = vmatmul.mubr.bf16.gmra.mrb[0].mxu0 %v111
  %v168 = vpop.f32.mrb[0].mxu0
  %v169 = vadd.f32 %v52, %v168
  %v170 = vpop.f32.mrb[0].mxu0
  %v171 = vadd.f32 %v56, %v170
  %v172 = vpop.f32.mrb[0].mxu0
  %v173 = vadd.f32 %v52, %v172
  %v174 = vpop.f32.mrb[0].mxu0
  %v175 = vadd.f32 %v56, %v174
  %176 = vmatprep.mubr.bf16.mxu0 0
  %177 = vmatmul.mubr.bf16.gmra.mrb[0].mxu0 %v114
  %v178 = vpop.f32.mrb[0].mxu0
  %v179 = vadd.f32 %v52, %v178
  %v180 = vpop.f32.mrb[0].mxu0
  %v181 = vadd.f32 %v56, %v180
  %v182 = vpop.f32.mrb[0].mxu0
  %v183 = vadd.f32 %v52, %v182
  %v184 = vpop.f32.mrb[0].mxu0
  %v185 = vadd.f32 %v56, %v184
  %186 = vmatprep.mubr.bf16.mxu0 0
  %187 = vmatmul.mubr.bf16.gmra.mrb[0].mxu0 %v117
  %v188 = vpop.f32.mrb[0].mxu0
  %v189 = vadd.f32 %v52, %v188
  %v190 = vpop.f32.mrb[0].mxu0
  %v191 = vadd.f32 %v56, %v190
  %v192 = vpop.f32.mrb[0].mxu0
  %v193 = vadd.f32 %v52, %v192
  %v194 = vpop.f32.mrb[0].mxu0
  %v195 = vadd.f32 %v56, %v194
  %196 = vmatprep.mubr.bf16.mxu0 0
  %197 = vmatmul.mubr.bf16.gmra.mrb[0].mxu0 %v120
  %v198 = vpop.f32.mrb[0].mxu0
  %v199 = vadd.f32 %v52, %v198
  %v200 = vpop.f32.mrb[0].mxu0
  %v201 = vadd.f32 %v56, %v200
  %v202 = vpop.f32.mrb[0].mxu0
  %v203 = vadd.f32 %v52, %v202
  %v204 = vpop.f32.mrb[0].mxu0
  %v205 = vadd.f32 %v56, %v204
  %206 = vmatprep.mubr.bf16.mxu0 0
  %207 = vmatmul.mubr.bf16.gmra.mrb[0].mxu0 %v123
  %v208 = vpop.f32.mrb[0].mxu0
  %v209 = vadd.f32 %v52, %v208
  %v210 = vpop.f32.mrb[0].mxu0
  %v211 = vadd.f32 %v56, %v210
  %v212 = vpop.f32.mrb[0].mxu0
  %v213 = vadd.f32 %v52, %v212
  %v214 = vpop.f32.mrb[0].mxu0
  %v215 = vadd.f32 %v56, %v214
  %216 = vmatprep.mubr.bf16.mxu0 0
  %217 = vmatmul.mubr.bf16.gmra.mrb[0].mxu0 %v126
  %v218 = vpop.f32.mrb[0].mxu0
  %v219 = vadd.f32 %v52, %v218
  %v220 = vpop.f32.mrb[0].mxu0
  %v221 = vadd.f32 %v56, %v220
  %v222 = vpop.f32.mrb[0].mxu0
  %v223 = vadd.f32 %v52, %v222
  %v224 = vpop.f32.mrb[0].mxu0
  %v225 = vadd.f32 %v56, %v224
  %226 = vmatprep.mubr.bf16.mxu0 0
  %227 = vmatmul.mubr.bf16.gmra.mrb[0].mxu0 %v129
  %v228 = vpop.f32.mrb[0].mxu0
  %v229 = vadd.f32 %v52, %v228
  %v230 = vpop.f32.mrb[0].mxu0
  %v231 = vadd.f32 %v56, %v230
  %v232 = vpop.f32.mrb[0].mxu0
  %v233 = vadd.f32 %v52, %v232
  %v234 = vpop.f32.mrb[0].mxu0
  %v235 = vadd.f32 %v56, %v234
  %236 = vmatprep.mubr.bf16.mxu0 0
  %237 = vmatmul.mubr.bf16.gmra.mrb[0].mxu0 %v132
  %v238 = vpop.f32.mrb[0].mxu0
  %v239 = vadd.f32 %v52, %v238
  %v240 = vpop.f32.mrb[0].mxu0
  %v241 = vadd.f32 %v56, %v240
  %v242 = vpop.f32.mrb[0].mxu0
  %v243 = vadd.f32 %v52, %v242
  %v244 = vpop.f32.mrb[0].mxu0
  %v245 = vadd.f32 %v56, %v244
  %246 = vdwg.mxu0
  %v247 = vmax.f32 %v169, 0.0
  %v248 = vmax.f32 %v171, 0.0
  %v249 = vmax.f32 %v173, 0.0
  %v250 = vmax.f32 %v175, 0.0
  %v251 = vmax.f32 %v179, 0.0
  %v252 = vmax.f32 %v181, 0.0
  %v253 = vmax.f32 %v183, 0.0
  %v254 = vmax.f32 %v185, 0.0
  %v255 = vmax.f32 %v189, 0.0
  %v256 = vmax.f32 %v191, 0.0
  %v257 = vmax.f32 %v193, 0.0
  %v258 = vmax.f32 %v195, 0.0
  %v259 = vmax.f32 %v199, 0.0
  %v260 = vmax.f32 %v201, 0.0
  %v261 = vmax.f32 %v203, 0.0
  %v262 = vmax.f32 %v205, 0.0
  %v263 = vmax.f32 %v209, 0.0
  %v264 = vmax.f32 %v211, 0.0
  %v265 = vmax.f32 %v213, 0.0
  %v266 = vmax.f32 %v215, 0.0
  %v267 = vmax.f32 %v219, 0.0
  %v268 = vmax.f32 %v221, 0.0
  %v269 = vmax.f32 %v223, 0.0
  %v270 = vmax.f32 %v225, 0.0
  %v271 = vmax.f32 %v229, 0.0
  %v272 = vmax.f32 %v231, 0.0
  %v273 = vmax.f32 %v233, 0.0
  %v274 = vmax.f32 %v235, 0.0
  %v275 = vmax.f32 %v239, 0.0
  %v276 = vmax.f32 %v241, 0.0
  %v277 = vmax.f32 %v243, 0.0
  %v278 = vmax.f32 %v245, 0.0
  %v279 = vpack.c.bf16 %v249, %v247
  %v280 = vpack.c.bf16 %v250, %v248
  %v281 = vpack.c.bf16 %v253, %v251
  %v282 = vpack.c.bf16 %v254, %v252
  %v283 = vpack.c.bf16 %v257, %v255
  %v284 = vpack.c.bf16 %v258, %v256
  %v285 = vpack.c.bf16 %v261, %v259
  %v286 = vpack.c.bf16 %v262, %v260
  %v287 = vpack.c.bf16 %v265, %v263
  %v288 = vpack.c.bf16 %v266, %v264
  %v289 = vpack.c.bf16 %v269, %v267
  %v290 = vpack.c.bf16 %v270, %v268
  %v291 = vpack.c.bf16 %v273, %v271
  %v292 = vpack.c.bf16 %v274, %v272
  %v293 = vpack.c.bf16 %v277, %v275
  %v294 = vpack.c.bf16 %v278, %v276
  %v295 = vld [vmem:[%s3] sm:$0xff]
  %v296 = vld [vmem:[%s3 + $0x8] sm:$0xff]
  %v297 = vld [vmem:[%s3 + $0x10] sm:$0xff]
  %v298 = vld [vmem:[%s3 + $0x18] sm:$0xff]
  %v299 = vld [vmem:[%s3 + $0x20] sm:$0xff]
  %v300 = vld [vmem:[%s3 + $0x28] sm:$0xff]
  %v301 = vld [vmem:[%s3 + $0x30] sm:$0xff]
  %v302 = vld [vmem:[%s3 + $0x38] sm:$0xff]
  %v303 = vld [vmem:[%s3 + $0x40] sm:$0xff]
  %v304 = vld [vmem:[%s3 + $0x48] sm:$0xff]
  %v305 = vld [vmem:[%s3 + $0x50] sm:$0xff]
  %v306 = vld [vmem:[%s3 + $0x58] sm:$0xff]
  %v307 = vld [vmem:[%s3 + $0x60] sm:$0xff]
  %v308 = vld [vmem:[%s3 + $0x68] sm:$0xff]
  %v309 = vld [vmem:[%s3 + $0x70] sm:$0xff]
  %v310 = vld [vmem:[%s3 + $0x78] sm:$0xff]
  %v311 = vld [vmem:[%s3 + $0x80] sm:$0xff]
  %v312 = vld [vmem:[%s3 + $0x88] sm:$0xff]
  %v313 = vld [vmem:[%s3 + $0x90] sm:$0xff]
  %v314 = vld [vmem:[%s3 + $0x98] sm:$0xff]
  %v315 = vld [vmem:[%s3 + $0xa0] sm:$0xff]
  %v316 = vld [vmem:[%s3 + $0xa8] sm:$0xff]
  %v317 = vld [vmem:[%s3 + $0xb0] sm:$0xff]
  %v318 = vld [vmem:[%s3 + $0xb8] sm:$0xff]
  %v319 = vld [vmem:[%s3 + $0xc0] sm:$0xff]
  %v320 = vld [vmem:[%s3 + $0xc8] sm:$0xff]
  %v321 = vld [vmem:[%s3 + $0xd0] sm:$0xff]
  %v322 = vld [vmem:[%s3 + $0xd8] sm:$0xff]
  %v323 = vld [vmem:[%s3 + $0xe0] sm:$0xff]
  %v324 = vld [vmem:[%s3 + $0xe8] sm:$0xff]
  %v325 = vld [vmem:[%s3 + $0xf0] sm:$0xff]
  %v326 = vld [vmem:[%s3 + $0xf8] sm:$0xff]
  %v327 = vld [vmem:[%s4] sm:$0x3]
  %v329 = vlaneseq
  %v330 = vshrl.u32 %v329, 7
  %v331 = vsub.s32 0, %v330
  %v332 = vrot.slane %v327, %v331
  %v333 = vlaneseq
  %v334 = vshrl.u32 %v333, 7
  %v335 = vsub.s32 1, %v334
  %v336 = vrot.slane %v327, %v335
  %v371 = vunpack.c.l.b16 %v295
  %v372 = vunpack.c.h.b16 %v295
  %v373 = vunpack.c.l.b16 %v296
  %v374 = vunpack.c.h.b16 %v296
  %v375 = vunpack.c.l.b16 %v297
  %v376 = vunpack.c.h.b16 %v297
  %v377 = vunpack.c.l.b16 %v298
  %v378 = vunpack.c.h.b16 %v298
  %v379 = vunpack.c.l.b16 %v299
  %v380 = vunpack.c.h.b16 %v299
  %v381 = vunpack.c.l.b16 %v300
  %v382 = vunpack.c.h.b16 %v300
  %v383 = vunpack.c.l.b16 %v301
  %v384 = vunpack.c.h.b16 %v301
  %v385 = vunpack.c.l.b16 %v302
  %v386 = vunpack.c.h.b16 %v302
  %v387 = vunpack.c.l.b16 %v303
  %v388 = vunpack.c.h.b16 %v303
  %v389 = vunpack.c.l.b16 %v304
  %v390 = vunpack.c.h.b16 %v304
  %v391 = vunpack.c.l.b16 %v305
  %v392 = vunpack.c.h.b16 %v305
  %v393 = vunpack.c.l.b16 %v306
  %v394 = vunpack.c.h.b16 %v306
  %v395 = vunpack.c.l.b16 %v307
  %v396 = vunpack.c.h.b16 %v307
  %v397 = vunpack.c.l.b16 %v308
  %v398 = vunpack.c.h.b16 %v308
  %v399 = vunpack.c.l.b16 %v309
  %v400 = vunpack.c.h.b16 %v309
  %v401 = vunpack.c.l.b16 %v310
  %v402 = vunpack.c.h.b16 %v310
  %v403 = vunpack.c.l.b16 %v311
  %v404 = vunpack.c.h.b16 %v311
  %v405 = vunpack.c.l.b16 %v312
  %v406 = vunpack.c.h.b16 %v312
  %v407 = vunpack.c.l.b16 %v313
  %v408 = vunpack.c.h.b16 %v313
  %v409 = vunpack.c.l.b16 %v314
  %v410 = vunpack.c.h.b16 %v314
  %v411 = vunpack.c.l.b16 %v315
  %v412 = vunpack.c.h.b16 %v315
  %v413 = vunpack.c.l.b16 %v316
  %v414 = vunpack.c.h.b16 %v316
  %v415 = vunpack.c.l.b16 %v317
  %v416 = vunpack.c.h.b16 %v317
  %v417 = vunpack.c.l.b16 %v318
  %v418 = vunpack.c.h.b16 %v318
  %v419 = vunpack.c.l.b16 %v319
  %v420 = vunpack.c.h.b16 %v319
  %v421 = vunpack.c.l.b16 %v320
  %v422 = vunpack.c.h.b16 %v320
  %v423 = vunpack.c.l.b16 %v321
  %v424 = vunpack.c.h.b16 %v321
  %v425 = vunpack.c.l.b16 %v322
  %v426 = vunpack.c.h.b16 %v322
  %v427 = vunpack.c.l.b16 %v323
  %v428 = vunpack.c.h.b16 %v323
  %v429 = vunpack.c.l.b16 %v324
  %v430 = vunpack.c.h.b16 %v324
  %v431 = vunpack.c.l.b16 %v325
  %v432 = vunpack.c.h.b16 %v325
  %v433 = vunpack.c.l.b16 %v326
  %v434 = vunpack.c.h.b16 %v326
  %v435 = vpack.c.b16 %v373, %v371
  %v436 = vpack.c.b16 %v374, %v372
  %v437 = vpack.c.b16 %v377, %v375
  %v438 = vpack.c.b16 %v378, %v376
  %v439 = vpack.c.b16 %v381, %v379
  %v440 = vpack.c.b16 %v382, %v380
  %v441 = vpack.c.b16 %v385, %v383
  %v442 = vpack.c.b16 %v386, %v384
  %v443 = vpack.c.b16 %v389, %v387
  %v444 = vpack.c.b16 %v390, %v388
  %v445 = vpack.c.b16 %v393, %v391
  %v446 = vpack.c.b16 %v394, %v392
  %v447 = vpack.c.b16 %v397, %v395
  %v448 = vpack.c.b16 %v398, %v396
  %v449 = vpack.c.b16 %v401, %v399
  %v450 = vpack.c.b16 %v402, %v400
  %v451 = vpack.c.b16 %v405, %v403
  %v452 = vpack.c.b16 %v406, %v404
  %v453 = vpack.c.b16 %v409, %v407
  %v454 = vpack.c.b16 %v410, %v408
  %v455 = vpack.c.b16 %v413, %v411
  %v456 = vpack.c.b16 %v414, %v412
  %v457 = vpack.c.b16 %v417, %v415
  %v458 = vpack.c.b16 %v418, %v416
  %v459 = vpack.c.b16 %v421, %v419
  %v460 = vpack.c.b16 %v422, %v420
  %v461 = vpack.c.b16 %v425, %v423
  %v462 = vpack.c.b16 %v426, %v424
  %v463 = vpack.c.b16 %v429, %v427
  %v464 = vpack.c.b16 %v430, %v428
  %v465 = vpack.c.b16 %v433, %v431
  %v466 = vpack.c.b16 %v434, %v432
  %499 = vmatprep.subr.bf16.mxu0 %v436
  %500 = vmatpush1.bf16.msra.mxu0 %v435
  %501 = vmatprep.subr.bf16.mxu0 %v438
  %502 = vmatpush1.bf16.msra.mxu0 %v437
  %503 = vmatprep.subr.bf16.mxu0 %v440
  %504 = vmatpush1.bf16.msra.mxu0 %v439
  %505 = vmatprep.subr.bf16.mxu0 %v442
  %506 = vmatpush1.bf16.msra.mxu0 %v441
  %507 = vmatprep.subr.bf16.mxu0 %v444
  %508 = vmatpush1.bf16.msra.mxu0 %v443
  %509 = vmatprep.subr.bf16.mxu0 %v446
  %510 = vmatpush1.bf16.msra.mxu0 %v445
  %511 = vmatprep.subr.bf16.mxu0 %v448
  %512 = vmatpush1.bf16.msra.mxu0 %v447
  %513 = vmatprep.subr.bf16.mxu0 %v450
  %514 = vmatpush1.bf16.msra.mxu0 %v449
  %515 = vmatprep.subr.bf16.mxu0 %v452
  %516 = vmatpush1.bf16.msra.mxu0 %v451
  %517 = vmatprep.subr.bf16.mxu0 %v454
  %518 = vmatpush1.bf16.msra.mxu0 %v453
  %519 = vmatprep.subr.bf16.mxu0 %v456
  %520 = vmatpush1.bf16.msra.mxu0 %v455
  %521 = vmatprep.subr.bf16.mxu0 %v458
  %522 = vmatpush1.bf16.msra.mxu0 %v457
  %523 = vmatprep.subr.bf16.mxu0 %v460
  %524 = vmatpush1.bf16.msra.mxu0 %v459
  %525 = vmatprep.subr.bf16.mxu0 %v462
  %526 = vmatpush1.bf16.msra.mxu0 %v461
  %527 = vmatprep.subr.bf16.mxu0 %v464
  %528 = vmatpush1.bf16.msra.mxu0 %v463
  %529 = vmatprep.subr.bf16.mxu0 %v466
  %530 = vmatpush1.bf16.msra.mxu0 %v465
  %531 = vmatprep.mubr.bf16.mxu0 %v280
  %532 = vmatmul.mubr.bf16.gmra.mrb[0].mxu0 %v279
  %v533 = vpop.f32.mrb[0].mxu0
  %v534 = vadd.f32 %v332, %v533
  %v535 = vpop.f32.mrb[0].mxu0
  %v536 = vadd.f32 %v336, %v535
  %v537 = vpop.f32.mrb[0].mxu0
  %v538 = vadd.f32 %v332, %v537
  %v539 = vpop.f32.mrb[0].mxu0
  %v540 = vadd.f32 %v336, %v539
  %541 = vmatprep.mubr.bf16.mxu0 %v282
  %542 = vmatmul.mubr.bf16.gmra.mrb[0].mxu0 %v281
  %v543 = vpop.f32.mrb[0].mxu0
  %v544 = vadd.f32 %v332, %v543
  %v545 = vpop.f32.mrb[0].mxu0
  %v546 = vadd.f32 %v336, %v545
  %v547 = vpop.f32.mrb[0].mxu0
  %v548 = vadd.f32 %v332, %v547
  %v549 = vpop.f32.mrb[0].mxu0
  %v550 = vadd.f32 %v336, %v549
  %551 = vmatprep.mubr.bf16.mxu0 %v284
  %552 = vmatmul.mubr.bf16.gmra.mrb[0].mxu0 %v283
  %v553 = vpop.f32.mrb[0].mxu0
  %v554 = vadd.f32 %v332, %v553
  %v555 = vpop.f32.mrb[0].mxu0
  %v556 = vadd.f32 %v336, %v555
  %v557 = vpop.f32.mrb[0].mxu0
  %v558 = vadd.f32 %v332, %v557
  %v559 = vpop.f32.mrb[0].mxu0
  %v560 = vadd.f32 %v336, %v559
  %561 = vmatprep.mubr.bf16.mxu0 %v286
  %562 = vmatmul.mubr.bf16.gmra.mrb[0].mxu0 %v285
  %v563 = vpop.f32.mrb[0].mxu0
  %v564 = vadd.f32 %v332, %v563
  %v565 = vpop.f32.mrb[0].mxu0
  %v566 = vadd.f32 %v336, %v565
  %v567 = vpop.f32.mrb[0].mxu0
  %v568 = vadd.f32 %v332, %v567
  %v569 = vpop.f32.mrb[0].mxu0
  %v570 = vadd.f32 %v336, %v569
  %571 = vmatprep.mubr.bf16.mxu0 %v288
  %572 = vmatmul.mubr.bf16.gmra.mrb[0].mxu0 %v287
  %v573 = vpop.f32.mrb[0].mxu0
  %v574 = vadd.f32 %v332, %v573
  %v575 = vpop.f32.mrb[0].mxu0
  %v576 = vadd.f32 %v336, %v575
  %v577 = vpop.f32.mrb[0].mxu0
  %v578 = vadd.f32 %v332, %v577
  %v579 = vpop.f32.mrb[0].mxu0
  %v580 = vadd.f32 %v336, %v579
  %581 = vmatprep.mubr.bf16.mxu0 %v290
  %582 = vmatmul.mubr.bf16.gmra.mrb[0].mxu0 %v289
  %v583 = vpop.f32.mrb[0].mxu0
  %v584 = vadd.f32 %v332, %v583
  %v585 = vpop.f32.mrb[0].mxu0
  %v586 = vadd.f32 %v336, %v585
  %v587 = vpop.f32.mrb[0].mxu0
  %v588 = vadd.f32 %v332, %v587
  %v589 = vpop.f32.mrb[0].mxu0
  %v590 = vadd.f32 %v336, %v589
  %591 = vmatprep.mubr.bf16.mxu0 %v292
  %592 = vmatmul.mubr.bf16.gmra.mrb[0].mxu0 %v291
  %v593 = vpop.f32.mrb[0].mxu0
  %v594 = vadd.f32 %v332, %v593
  %v595 = vpop.f32.mrb[0].mxu0
  %v596 = vadd.f32 %v336, %v595
  %v597 = vpop.f32.mrb[0].mxu0
  %v598 = vadd.f32 %v332, %v597
  %v599 = vpop.f32.mrb[0].mxu0
  %v600 = vadd.f32 %v336, %v599
  %601 = vmatprep.mubr.bf16.mxu0 %v294
  %602 = vmatmul.mubr.bf16.gmra.mrb[0].mxu0 %v293
  %v603 = vpop.f32.mrb[0].mxu0
  %v604 = vadd.f32 %v332, %v603
  %v605 = vpop.f32.mrb[0].mxu0
  %v606 = vadd.f32 %v336, %v605
  %v607 = vpop.f32.mrb[0].mxu0
  %v608 = vadd.f32 %v332, %v607
  %v609 = vpop.f32.mrb[0].mxu0
  %v610 = vadd.f32 %v336, %v609
  %611 = vdwg.mxu0
  %v612 = vmax.f32 %v534, 0.0
  %v613 = vmax.f32 %v536, 0.0
  %v614 = vmax.f32 %v538, 0.0
  %v615 = vmax.f32 %v540, 0.0
  %v616 = vmax.f32 %v544, 0.0
  %v617 = vmax.f32 %v546, 0.0
  %v618 = vmax.f32 %v548, 0.0
  %v619 = vmax.f32 %v550, 0.0
  %v620 = vmax.f32 %v554, 0.0
  %v621 = vmax.f32 %v556, 0.0
  %v622 = vmax.f32 %v558, 0.0
  %v623 = vmax.f32 %v560, 0.0
  %v624 = vmax.f32 %v564, 0.0
  %v625 = vmax.f32 %v566, 0.0
  %v626 = vmax.f32 %v568, 0.0
  %v627 = vmax.f32 %v570, 0.0
  %v628 = vmax.f32 %v574, 0.0
  %v629 = vmax.f32 %v576, 0.0
  %v630 = vmax.f32 %v578, 0.0
  %v631 = vmax.f32 %v580, 0.0
  %v632 = vmax.f32 %v584, 0.0
  %v633 = vmax.f32 %v586, 0.0
  %v634 = vmax.f32 %v588, 0.0
  %v635 = vmax.f32 %v590, 0.0
  %v636 = vmax.f32 %v594, 0.0
  %v637 = vmax.f32 %v596, 0.0
  %v638 = vmax.f32 %v598, 0.0
  %v639 = vmax.f32 %v600, 0.0
  %v640 = vmax.f32 %v604, 0.0
  %v641 = vmax.f32 %v606, 0.0
  %v642 = vmax.f32 %v608, 0.0
  %v643 = vmax.f32 %v610, 0.0
  %v644 = vld [vmem:[%s5] sm:$0x3]
  %v646 = vlaneseq
  %v647 = vshrl.u32 %v646, 7
  %v648 = vsub.s32 0, %v647
  %v649 = vrot.slane %v644, %v648
  %v650 = vlaneseq
  %v651 = vshrl.u32 %v650, 7
  %v652 = vsub.s32 1, %v651
  %v653 = vrot.slane %v644, %v652
  %v656 = vmul.f32 %v612, %v649
  %v657 = vmul.f32 %v613, %v653
  %v658 = vmul.f32 %v614, %v649
  %v659 = vmul.f32 %v615, %v653
  %v660 = vmul.f32 %v616, %v649
  %v661 = vmul.f32 %v617, %v653
  %v662 = vmul.f32 %v618, %v649
  %v663 = vmul.f32 %v619, %v653
  %v664 = vmul.f32 %v620, %v649
  %v665 = vmul.f32 %v621, %v653
  %v666 = vmul.f32 %v622, %v649
  %v667 = vmul.f32 %v623, %v653
  %v668 = vmul.f32 %v624, %v649
  %v669 = vmul.f32 %v625, %v653
  %v670 = vmul.f32 %v626, %v649
  %v671 = vmul.f32 %v627, %v653
  %v672 = vmul.f32 %v628, %v649
  %v673 = vmul.f32 %v629, %v653
  %v674 = vmul.f32 %v630, %v649
  %v675 = vmul.f32 %v631, %v653
  %v676 = vmul.f32 %v632, %v649
  %v677 = vmul.f32 %v633, %v653
  %v678 = vmul.f32 %v634, %v649
  %v679 = vmul.f32 %v635, %v653
  %v680 = vmul.f32 %v636, %v649
  %v681 = vmul.f32 %v637, %v653
  %v682 = vmul.f32 %v638, %v649
  %v683 = vmul.f32 %v639, %v653
  %v684 = vmul.f32 %v640, %v649
  %v685 = vmul.f32 %v641, %v653
  %v686 = vmul.f32 %v642, %v649
  %v687 = vmul.f32 %v643, %v653
  %v688 = vadd.f32 %v656, %v657
  %689 = vadd.xlane.f32.xlu0 %v688
  %v690 = vpop.xlane.xlu0 %689
  %v691 = vadd.f32 %v658, %v659
  %692 = vadd.xlane.f32.xlu0 %v691
  %v693 = vpop.xlane.xlu0 %692
  %v694 = vadd.f32 %v660, %v661
  %695 = vadd.xlane.f32.xlu0 %v694
  %v696 = vpop.xlane.xlu0 %695
  %v697 = vadd.f32 %v662, %v663
  %698 = vadd.xlane.f32.xlu0 %v697
  %v699 = vpop.xlane.xlu0 %698
  %v700 = vadd.f32 %v664, %v665
  %701 = vadd.xlane.f32.xlu0 %v700
  %v702 = vpop.xlane.xlu0 %701
  %v703 = vadd.f32 %v666, %v667
  %704 = vadd.xlane.f32.xlu0 %v703
  %v705 = vpop.xlane.xlu0 %704
  %v706 = vadd.f32 %v668, %v669
  %707 = vadd.xlane.f32.xlu0 %v706
  %v708 = vpop.xlane.xlu0 %707
  %v709 = vadd.f32 %v670, %v671
  %710 = vadd.xlane.f32.xlu0 %v709
  %v711 = vpop.xlane.xlu0 %710
  %v712 = vadd.f32 %v672, %v673
  %713 = vadd.xlane.f32.xlu0 %v712
  %v714 = vpop.xlane.xlu0 %713
  %v715 = vadd.f32 %v674, %v675
  %716 = vadd.xlane.f32.xlu0 %v715
  %v717 = vpop.xlane.xlu0 %716
  %v718 = vadd.f32 %v676, %v677
  %719 = vadd.xlane.f32.xlu0 %v718
  %v720 = vpop.xlane.xlu0 %719
  %v721 = vadd.f32 %v678, %v679
  %722 = vadd.xlane.f32.xlu0 %v721
  %v723 = vpop.xlane.xlu0 %722
  %v724 = vadd.f32 %v680, %v681
  %725 = vadd.xlane.f32.xlu0 %v724
  %v726 = vpop.xlane.xlu0 %725
  %v727 = vadd.f32 %v682, %v683
  %728 = vadd.xlane.f32.xlu0 %v727
  %v729 = vpop.xlane.xlu0 %728
  %v730 = vadd.f32 %v684, %v685
  %731 = vadd.xlane.f32.xlu0 %v730
  %v732 = vpop.xlane.xlu0 %731
  %v733 = vadd.f32 %v686, %v687
  %734 = vadd.xlane.f32.xlu0 %v733
  %v735 = vpop.xlane.xlu0 %734
  %v736 = vld [vmem:[#allocation2] sm:$0x1]
  %s737 = vtos %v736
  %v738 = vstv %s737
  %v739 = vadd.f32 %v690, %v738
  %v740 = vadd.f32 %v693, %v738
  %v741 = vadd.f32 %v696, %v738
  %v742 = vadd.f32 %v699, %v738
  %v743 = vadd.f32 %v702, %v738
  %v744 = vadd.f32 %v705, %v738
  %v745 = vadd.f32 %v708, %v738
  %v746 = vadd.f32 %v711, %v738
  %v747 = vadd.f32 %v714, %v738
  %v748 = vadd.f32 %v717, %v738
  %v749 = vadd.f32 %v720, %v738
  %v750 = vadd.f32 %v723, %v738
  %v751 = vadd.f32 %v726, %v738
  %v752 = vadd.f32 %v729, %v738
  %v753 = vadd.f32 %v732, %v738
  %v754 = vadd.f32 %v735, %v738
  %v771 = vlaneseq
  %v772 = vand.u32 %v771, 127
  %v773 = vlaneseq
  %v774 = vshrl.u32 %v773, 7
  %v775 = vsub.s32 %v772, %v774
  %v776 = vrot.slane %v739, %v775
  %v777 = vadd.s32 %v772, 4294967288
  %v778 = vlaneseq
  %v779 = vshrl.u32 %v778, 7
  %v780 = vsub.s32 %v777, %v779
  %v781 = vrot.slane %v740, %v780
  %vm782 = vcmask 130112
  %v783 = vsel %vm782, %v781, %v776
  %v784 = vadd.s32 %v772, 4294967280
  %v785 = vlaneseq
  %v786 = vshrl.u32 %v785, 7
  %v787 = vsub.s32 %v784, %v786
  %v788 = vrot.slane %v741, %v787
  %vm789 = vcmask 195712
  %v790 = vsel %vm789, %v788, %v783
  %v791 = vadd.s32 %v772, 4294967272
  %v792 = vlaneseq
  %v793 = vshrl.u32 %v792, 7
  %v794 = vsub.s32 %v791, %v793
  %v795 = vrot.slane %v742, %v794
  %vm796 = vcmask 261312
  %v797 = vsel %vm796, %v795, %v790
  %v798 = vadd.s32 %v772, 4294967264
  %v799 = vlaneseq
  %v800 = vshrl.u32 %v799, 7
  %v801 = vsub.s32 %v798, %v800
  %v802 = vrot.slane %v743, %v801
  %vm803 = vcmask 326912
  %v804 = vsel %vm803, %v802, %v797
  %v805 = vadd.s32 %v772, 4294967256
  %v806 = vlaneseq
  %v807 = vshrl.u32 %v806, 7
  %v808 = vsub.s32 %v805, %v807
  %v809 = vrot.slane %v744, %v808
  %vm810 = vcmask 392512
  %v811 = vsel %vm810, %v809, %v804
  %v812 = vadd.s32 %v772, 4294967248
  %v813 = vlaneseq
  %v814 = vshrl.u32 %v813, 7
  %v815 = vsub.s32 %v812, %v814
  %v816 = vrot.slane %v745, %v815
  %vm817 = vcmask 458112
  %v818 = vsel %vm817, %v816, %v811
  %v819 = vadd.s32 %v772, 4294967240
  %v820 = vlaneseq
  %v821 = vshrl.u32 %v820, 7
  %v822 = vsub.s32 %v819, %v821
  %v823 = vrot.slane %v746, %v822
  %vm824 = vcmask 523712
  %v825 = vsel %vm824, %v823, %v818
  %v826 = vadd.s32 %v772, 4294967232
  %v827 = vlaneseq
  %v828 = vshrl.u32 %v827, 7
  %v829 = vsub.s32 %v826, %v828
  %v830 = vrot.slane %v747, %v829
  %vm831 = vcmask 589312
  %v832 = vsel %vm831, %v830, %v825
  %v833 = vadd.s32 %v772, 4294967224
  %v834 = vlaneseq
  %v835 = vshrl.u32 %v834, 7
  %v836 = vsub.s32 %v833, %v835
  %v837 = vrot.slane %v748, %v836
  %vm838 = vcmask 654912
  %v839 = vsel %vm838, %v837, %v832
  %v840 = vadd.s32 %v772, 4294967216
  %v841 = vlaneseq
  %v842 = vshrl.u32 %v841, 7
  %v843 = vsub.s32 %v840, %v842
  %v844 = vrot.slane %v749, %v843
  %vm845 = vcmask 720512
  %v846 = vsel %vm845, %v844, %v839
  %v847 = vadd.s32 %v772, 4294967208
  %v848 = vlaneseq
  %v849 = vshrl.u32 %v848, 7
  %v850 = vsub.s32 %v847, %v849
  %v851 = vrot.slane %v750, %v850
  %vm852 = vcmask 786112
  %v853 = vsel %vm852, %v851, %v846
  %v854 = vadd.s32 %v772, 4294967200
  %v855 = vlaneseq
  %v856 = vshrl.u32 %v855, 7
  %v857 = vsub.s32 %v854, %v856
  %v858 = vrot.slane %v751, %v857
  %vm859 = vcmask 851712
  %v860 = vsel %vm859, %v858, %v853
  %v861 = vadd.s32 %v772, 4294967192
  %v862 = vlaneseq
  %v863 = vshrl.u32 %v862, 7
  %v864 = vsub.s32 %v861, %v863
  %v865 = vrot.slane %v752, %v864
  %vm866 = vcmask 917312
  %v867 = vsel %vm866, %v865, %v860
  %v868 = vadd.s32 %v772, 4294967184
  %v869 = vlaneseq
  %v870 = vshrl.u32 %v869, 7
  %v871 = vsub.s32 %v868, %v870
  %v872 = vrot.slane %v753, %v871
  %vm873 = vcmask 982912
  %v874 = vsel %vm873, %v872, %v867
  %v875 = vadd.s32 %v772, 4294967176
  %v876 = vlaneseq
  %v877 = vshrl.u32 %v876, 7
  %v878 = vsub.s32 %v875, %v877
  %v879 = vrot.slane %v754, %v878
  %vm880 = vcmask 1048512
  %v881 = vsel %vm880, %v879, %v874
  %883 = vst [vmem:[%s7] sm:$0x1] %v881
  // Predicated region
  $region30: #{value_network_forward.1} parent=0 // pred_check
    _
  $region31: #{value_network_forward.1} parent=0 // pred_check_branch
    %885 = sbr.rel (0) target = $region33
  $region32: #{value_network_forward.1} parent=0 // pred_region
    _
  $region33: #{value_network_forward.1} parent=0 // pred_fallthru
    _
  // Predicated region
  $region34: #{value_network_forward.1} parent=0 // pred_check
    _
  $region35: #{value_network_forward.1} parent=0 // pred_check_branch
    %887 = sbr.rel (0) target = $region37
  $region36: #{value_network_forward.1} parent=0 // pred_region
    _
  $region37: #{value_network_forward.1} parent=0 // pred_fallthru
    _

</llo_original>
